<compile_context>
chip_gen: v6e
topology: v6e:2x2x1
jax: 0.10.0
libtpu: 0.0.40
codegen_flags: <defaults>
</compile_context>

<pallas_src>
import jax
import jax.numpy as jnp
from jax.experimental import pallas as pl
from jax.experimental.pallas import tpu as pltpu


def _dma_copy_kernel(x_hbm_ref, o_hbm_ref, sem):
    """One whole-array HBM->HBM DMA; nothing touches VMEM or the vector units."""
    cp = pltpu.make_async_copy(x_hbm_ref, o_hbm_ref, sem)
    cp.start()
    cp.wait()


def _alias_kernel(x_hbm_ref, o_hbm_ref):
    """Output is aliased to the input buffer (input_output_aliases={0: 0})."""
    # o_hbm_ref already *is* x's buffer, so there is literally nothing to do:
    # the "copy" moves zero bytes.
    pass


def _identity_copy_dma(x: jax.Array) -> jax.Array:
    """Materialize a distinct copy of x with a single HBM->HBM DMA."""
    if x.size == 0:
        return jnp.copy(x)  # nothing to DMA
    return pl.pallas_call(
        _dma_copy_kernel,
        out_shape=jax.ShapeDtypeStruct(x.shape, x.dtype),
        in_specs=[pl.BlockSpec(memory_space=pl.ANY)],
        out_specs=pl.BlockSpec(memory_space=pl.ANY),
        scratch_shapes=[pltpu.SemaphoreType.DMA],
    )(x)


def _identity_alias(x: jax.Array) -> jax.Array:
    """Hand back a 'new' output handle aliased to the input buffer (zero bytes)."""
    return pl.pallas_call(
        _alias_kernel,
        out_shape=jax.ShapeDtypeStruct(x.shape, x.dtype),
        in_specs=[pl.BlockSpec(memory_space=pl.ANY)],
        out_specs=pl.BlockSpec(memory_space=pl.ANY),
        input_output_aliases={0: 0},
    )(x)


def identity_forward(x: jax.Array, *, materialize: bool = False,
                     donate: bool = False) -> jax.Array:
    """Pallas equivalent of Identity.forward(x) -> x.

    Default: return x unchanged (zero data movement -- the only way to beat
    the HBM copy roofline for an identity).

    materialize=True, donate=True : output handle aliases the input buffer
        (input_output_aliases={0: 0}); zero HBM traffic when the input is
        donated at the jit boundary.
    materialize=True, donate=False: distinct output buffer filled by one
        whole-array HBM->HBM DMA at full HBM bandwidth.
    """
    if not materialize:
        return x
    if donate:
        return _identity_alias(x)
    return _identity_copy_dma(x)


if __name__ == "__main__":
    key = jax.random.PRNGKey(0)
    # Identity(channel) takes a `channel` arg but allocates no parameters.
    x = jax.random.normal(key, (2, 4, 16, 16), dtype=jnp.float32)

    # 1) Zero-copy default path: output is literally the input.
    y = identity_forward(x)
    jax.block_until_ready(y)
    assert y.shape == x.shape and y.dtype == x.dtype
    assert bool(jnp.all(y == x))

    # 2) Materialized path: single HBM->HBM DMA into a distinct buffer.
    y_copy = identity_forward(x, materialize=True)
    jax.block_until_ready(y_copy)
    assert y_copy.shape == x.shape and y_copy.dtype == x.dtype
    assert bool(jnp.all(y_copy == x))

    # The DMA path has no lane/tiling constraints: element count not a
    # multiple of 128 (this previously hit a whole-array-in-VMEM fallback).
    x_odd = jax.random.normal(jax.random.PRNGKey(1), (3, 5, 7), dtype=jnp.float32)
    y_odd = identity_forward(x_odd, materialize=True)
    jax.block_until_ready(y_odd)
    assert y_odd.shape == x_odd.shape and y_odd.dtype == x_odd.dtype
    assert bool(jnp.all(y_odd == x_odd))

    # 3) Aliased path (donate=True): output handle aliases the input buffer.
    #    (Eager call here; under jit with donate_argnums it is truly zero-copy.)
    y_alias = identity_forward(x, materialize=True, donate=True)
    jax.block_until_ready(y_alias)
    assert y_alias.shape == x.shape and y_alias.dtype == x.dtype
    assert bool(jnp.all(y_alias == x))

    print("KERNEL_OK")
</pallas_src>

<mosaic_0001>
module attributes {stable_mosaic.version = 11 : i64} {
  func.func @_dma_copy_kernel(%arg0: memref<2x4x16x16xf32, #tpu.memory_space<any>>, %arg1: memref<2x4x16x16xf32, #tpu.memory_space<any>>, %arg2: memref<!tpu.dma_semaphore, #tpu.memory_space<semaphore_mem>>) attributes {dimension_semantics = [], scalar_prefetch = 0 : i64, scratch_operands = 1 : i64, tpu.core_type = #tpu.core_type<tc>} {
    tpu.enqueue_dma source(%arg0 : memref<2x4x16x16xf32, #tpu.memory_space<any>>) target(%arg1 : memref<2x4x16x16xf32, #tpu.memory_space<any>>) target_semaphore(%arg2 : memref<!tpu.dma_semaphore, #tpu.memory_space<semaphore_mem>>)
    tpu.wait_dma2 semaphore(%arg2 : memref<!tpu.dma_semaphore, #tpu.memory_space<semaphore_mem>>) src(%arg0 : memref<2x4x16x16xf32, #tpu.memory_space<any>>) dst(%arg1 : memref<2x4x16x16xf32, #tpu.memory_space<any>>)
    return
  }
}

</mosaic_0001>

<llo_original>
// kernel: tpu_custom_call.1
$region0: #{tpu_custom_call.1}
  #allocation0 [shape = 'u32[]', space=smem, size = 0x4, offset = 0x4, fixed_abs, tag = 'smem constant byte address 0x4 - core index']
  #allocation1 [shape = 'u32[144,128]{1,0:T(1,128)}', space=vmem, size = 0x12000, scoped, tag = 'internal scratch']
  #allocation2 [shape = 's32[1]{0}', space=sflag, size = 0x4, scoped, tag = 'scratch operand']
  #allocation3 [shape = 's32[]', space=sflag, size = 0x4, offset = 0, fixed_abs, tag = 'sflag constant byte address 0x0 - dummy sync flag']
  #allocation4 [shape = 'u32[0]{0}', space=smem, size = 0, offset = 0, fixed_abs, tag = 'smem constant byte address 0x0 - null']
  %s0 = inlined_call_operand.hbm [shape: f32[2,4,16,16], index: 0, kind: input, shape index: {}]
  %s1 = inlined_call_operand.hbm [shape: f32[2,4,16,16], index: 1, kind: output, shape index: {}]
  %s2 = sld [smem:[#allocation0]]
  $region2: #{tpu_custom_call.1} parent=0
    _
  %s4 = ssub.s32 1, %s2
  %s5 = scalar_select 0, %s4, %s2
  %s7 = sshll.u32 1, 14
  %s8 = sxor.u32 4294967295, %s7
  %12 = dma.general %s0, 2048, %s1, [#allocation2], 131072, [#allocation4], 0, 0
  %s13 = smul.u32 2, 4
  %s14 = smul.u32 %s13, 16
  %s15 = smul.u32 %s14, 1
  %s16 = sshll.u32 %s15, 4
  %17 = dma.done [#allocation2], %s16
  %18 = vsyncmov [#allocation2]
  %s19 = vpop.sfrf %18
  %p20 = scmp.eq.s32.totalorder %s19, 0
  %p21 = pneg %p20
  %23 = shalt.err (%p21)

</llo_original>
